<compile_context>
chip_gen: v7x
topology: tpu7x:2x2x1
jax: 0.10.0
libtpu: 0.0.40
codegen_flags: <defaults>
</compile_context>

<pallas_src>
import jax
import jax.numpy as jnp
from jax.experimental import pallas as pl
from jax.experimental.pallas import tpu as pltpu


_ROWS_PER_BLOCK = 32  # table rows gathered per grid step (multiple of 8)


def _gather_rows_kernel(pos_ref, table_hbm, out_ref, gather_buf, sems):
    # pos_ref    : (N_pad,) int32 in SMEM (scalar prefetch).
    # table_hbm  : (V, D) embedding table left in HBM (memory_space=pl.ANY).
    # out_ref    : (ROWS, D) VMEM output block for this grid step.
    # gather_buf : (ROWS, D) VMEM scratch the per-row DMAs land in.
    # sems       : (ROWS,) DMA semaphores.
    rows = out_ref.shape[0]
    base = pl.program_id(0) * rows

    copies = []
    for r in range(rows):                       # static unroll: issue all DMAs
        idx = pos_ref[base + r]
        cp = pltpu.make_async_copy(table_hbm.at[idx], gather_buf.at[r],
                                   sems.at[r])
        cp.start()
        copies.append(cp)
    for cp in copies:                           # then wait for all of them
        cp.wait()

    out_ref[...] = gather_buf[...]              # single lane-dense block store


def learned_position_embedding(input_ids, table, *, position_ids=None,
                               past_length=0, position_embedding_offset=0,
                               mask_padding_in_positional_embed=False,
                               pad_token_id=None,
                               rows_per_block=_ROWS_PER_BLOCK):
    """Pallas implementation of LearnedPositionEmbeddingLayer.forward."""
    B, S = input_ids.shape
    V, D = table.shape

    # ---- position ids (negligible integer work; computed in the wrapper) ---
    if position_ids is not None:
        assert position_ids.shape == input_ids.shape
        pos = position_ids.astype(jnp.int32)
    elif mask_padding_in_positional_embed:
        pad = 0 if pad_token_id is None else pad_token_id
        unmasked = jnp.arange(past_length + 1, S + past_length + 1,
                              dtype=jnp.int32)
        pos = (jnp.where(input_ids != pad, unmasked[None, :], 0)
               + position_embedding_offset)
        pos = jnp.broadcast_to(pos, (B, S))
    else:
        pos = (jnp.arange(past_length, S + past_length, dtype=jnp.int32)
               + position_embedding_offset)
        pos = jnp.broadcast_to(pos[None, :], (B, S))

    # Clip to the valid table range (jnp.take clipping semantics; PyTorch
    # nn.Embedding would raise on OOB — clipping is the safe choice here).
    N = B * S
    pos_flat = jnp.clip(pos.reshape(N), 0, V - 1).astype(jnp.int32)

    # Rows per block: multiple of 8 (sublane), capped, and no bigger than
    # needed for tiny problems.
    rows = int(max(8, min(rows_per_block, -(-N // 8) * 8)))
    n_pad = -(-N // rows) * rows
    if n_pad != N:
        pos_flat = jnp.pad(pos_flat, (0, n_pad - N))   # pad with row 0 (valid)
    n_blocks = n_pad // rows

    itemsize = jnp.dtype(table.dtype).itemsize
    cost = pl.CostEstimate(
        flops=0,
        transcendentals=0,
        bytes_accessed=int(2 * N * D * itemsize + n_pad * 4),
    )

    out_padded = pl.pallas_call(
        _gather_rows_kernel,
        out_shape=jax.ShapeDtypeStruct((n_pad, D), table.dtype),
        grid_spec=pltpu.PrefetchScalarGridSpec(
            num_scalar_prefetch=1,
            grid=(n_blocks,),
            in_specs=[
                # Table stays in HBM; rows are gathered manually by DMA.
                pl.BlockSpec(memory_space=pl.ANY),
            ],
            out_specs=pl.BlockSpec((rows, D), lambda i, pos: (i, 0)),
            scratch_shapes=[
                pltpu.VMEM((rows, D), table.dtype),
                pltpu.SemaphoreType.DMA((rows,)),
            ],
        ),
        compiler_params=pltpu.CompilerParams(
            dimension_semantics=("parallel",)),
        cost_estimate=cost,
    )(pos_flat, table)

    # TODO(synk): when position_ids is None and padding is not masked, the
    # gather is a contiguous table slice broadcast over batch; a slice-copy
    # fast path could skip the per-row DMAs entirely.
    return out_padded[:N].reshape(B, S, D)


def _reference(input_ids, table, *, position_ids=None, past_length=0,
               position_embedding_offset=0,
               mask_padding_in_positional_embed=False, pad_token_id=None):
    B, S = input_ids.shape
    if position_ids is None:
        if not mask_padding_in_positional_embed:
            position_ids = (jnp.arange(past_length, S + past_length,
                                       dtype=jnp.int32)
                            + position_embedding_offset)
            position_ids = jnp.broadcast_to(position_ids, (B, S))
        else:
            mask = input_ids != pad_token_id
            unmasked = jnp.arange(past_length + 1, S + past_length + 1,
                                  dtype=jnp.int32)
            position_ids = (jnp.where(mask, unmasked, 0)
                            + position_embedding_offset)
    return jnp.take(table, position_ids, axis=0)


if __name__ == "__main__":
    key = jax.random.PRNGKey(0)
    k_tab, k_tab2, k_ids = jax.random.split(key, 3)

    # Small shapes consistent with the module.
    batch_size = 2
    seq_len = 8
    max_position_embeddings = 16
    positional_embedding_size = 32
    position_embedding_offset = 0

    input_ids = jax.random.randint(k_ids, (batch_size, seq_len), 0, 10,
                                   dtype=jnp.int32)

    # --- Config 1: default (no padding masking) -----------------------------
    V1 = max_position_embeddings + position_embedding_offset
    table1 = jax.random.uniform(k_tab, (V1, positional_embedding_size),
                                dtype=jnp.float32, minval=-0.05, maxval=0.05)
    out1 = learned_position_embedding(
        input_ids, table1,
        past_length=2,
        position_embedding_offset=position_embedding_offset,
        mask_padding_in_positional_embed=False)
    ref1 = _reference(
        input_ids, table1,
        past_length=2,
        position_embedding_offset=position_embedding_offset,
        mask_padding_in_positional_embed=False)

    # --- Config 2: mask_padding_in_positional_embed=True, pad_token_id=0 ----
    V2 = max_position_embeddings + position_embedding_offset + 1
    table2 = jax.random.uniform(k_tab2, (V2, positional_embedding_size),
                                dtype=jnp.float32, minval=-0.05, maxval=0.05)
    out2 = learned_position_embedding(
        input_ids, table2,
        past_length=0,
        position_embedding_offset=position_embedding_offset,
        mask_padding_in_positional_embed=True,
        pad_token_id=0)
    ref2 = _reference(
        input_ids, table2,
        past_length=0,
        position_embedding_offset=position_embedding_offset,
        mask_padding_in_positional_embed=True,
        pad_token_id=0)

    # --- Config 3: caller-provided position_ids -----------------------------
    pos_ids = jnp.tile(jnp.arange(seq_len, dtype=jnp.int32)[None, :],
                       (batch_size, 1))
    out3 = learned_position_embedding(input_ids, table1, position_ids=pos_ids)
    ref3 = _reference(input_ids, table1, position_ids=pos_ids)

    jax.block_until_ready((out1, out2, out3))

    assert out1.shape == (batch_size, seq_len, positional_embedding_size)
    assert out1.dtype == jnp.float32
    assert jnp.allclose(out1, ref1, atol=1e-6)
    assert jnp.allclose(out2, ref2, atol=1e-6)
    assert jnp.allclose(out3, ref3, atol=1e-6)

    print("KERNEL_OK")
</pallas_src>

<mosaic_0001>
module attributes {stable_mosaic.version = 11 : i64} {
  func.func @_gather_rows_kernel(%arg0: i32, %arg1: memref<16xi32, #tpu.memory_space<smem>>, %arg2: memref<16x32xf32, #tpu.memory_space<any>>, %arg3: memref<16x32xf32, #tpu.memory_space<vmem>>, %arg4: memref<16x32xf32, #tpu.memory_space<vmem>>, %arg5: memref<16x!tpu.dma_semaphore, #tpu.memory_space<semaphore_mem>>) attributes {dimension_semantics = [#tpu.dimension_semantics<parallel>], iteration_bounds = array<i64: 1>, scalar_prefetch = 1 : i64, scratch_operands = 2 : i64, tpu.core_type = #tpu.core_type<tc>, window_params = [{}, {transform_indices = @transform_1, window_bounds = array<i64: 16, 32>}]} {
    %c16_i32 = arith.constant 16 : i32
    %0 = arith.muli %arg0, %c16_i32 : i32
    %c0_i32 = arith.constant 0 : i32
    %1 = arith.addi %0, %c0_i32 : i32
    %2 = arith.index_cast %1 : i32 to index
    %3 = memref.load %arg1[%2] : memref<16xi32, #tpu.memory_space<smem>>
    %c0_i32_0 = arith.constant 0 : i32
    %c0_i32_1 = arith.constant 0 : i32
    %c0_i32_2 = arith.constant 0 : i32
    %4 = tpu.memref_slice %arg2[%3, %c0_i32_2] : memref<16x32xf32, #tpu.memory_space<any>> -> memref<1x32xf32, #tpu.memory_space<any>>
    %5 = tpu.memref_squeeze %4 : memref<1x32xf32, #tpu.memory_space<any>> -> memref<32xf32, #tpu.memory_space<any>>
    %c0_i32_3 = arith.constant 0 : i32
    %6 = tpu.memref_slice %arg4[%c0_i32_0, %c0_i32_3] : memref<16x32xf32, #tpu.memory_space<vmem>> -> memref<1x32xf32, #tpu.memory_space<vmem>>
    %7 = tpu.memref_squeeze %6 : memref<1x32xf32, #tpu.memory_space<vmem>> -> memref<32xf32, #tpu.memory_space<vmem>>
    %8 = tpu.memref_slice %arg5[%c0_i32_1] : memref<16x!tpu.dma_semaphore, #tpu.memory_space<semaphore_mem>> -> memref<1x!tpu.dma_semaphore, #tpu.memory_space<semaphore_mem>>
    %9 = tpu.memref_squeeze %8 : memref<1x!tpu.dma_semaphore, #tpu.memory_space<semaphore_mem>> -> memref<!tpu.dma_semaphore, #tpu.memory_space<semaphore_mem>>
    tpu.enqueue_dma source(%5 : memref<32xf32, #tpu.memory_space<any>>) target(%7 : memref<32xf32, #tpu.memory_space<vmem>>) target_semaphore(%9 : memref<!tpu.dma_semaphore, #tpu.memory_space<semaphore_mem>>)
    %c1_i32 = arith.constant 1 : i32
    %10 = arith.addi %0, %c1_i32 : i32
    %11 = arith.index_cast %10 : i32 to index
    %12 = memref.load %arg1[%11] : memref<16xi32, #tpu.memory_space<smem>>
    %c1_i32_4 = arith.constant 1 : i32
    %c1_i32_5 = arith.constant 1 : i32
    %c0_i32_6 = arith.constant 0 : i32
    %13 = tpu.memref_slice %arg2[%12, %c0_i32_6] : memref<16x32xf32, #tpu.memory_space<any>> -> memref<1x32xf32, #tpu.memory_space<any>>
    %14 = tpu.memref_squeeze %13 : memref<1x32xf32, #tpu.memory_space<any>> -> memref<32xf32, #tpu.memory_space<any>>
    %c0_i32_7 = arith.constant 0 : i32
    %15 = tpu.memref_slice %arg4[%c1_i32_4, %c0_i32_7] : memref<16x32xf32, #tpu.memory_space<vmem>> -> memref<1x32xf32, #tpu.memory_space<vmem>>
    %16 = tpu.memref_squeeze %15 : memref<1x32xf32, #tpu.memory_space<vmem>> -> memref<32xf32, #tpu.memory_space<vmem>>
    %17 = tpu.memref_slice %arg5[%c1_i32_5] : memref<16x!tpu.dma_semaphore, #tpu.memory_space<semaphore_mem>> -> memref<1x!tpu.dma_semaphore, #tpu.memory_space<semaphore_mem>>
    %18 = tpu.memref_squeeze %17 : memref<1x!tpu.dma_semaphore, #tpu.memory_space<semaphore_mem>> -> memref<!tpu.dma_semaphore, #tpu.memory_space<semaphore_mem>>
    tpu.enqueue_dma source(%14 : memref<32xf32, #tpu.memory_space<any>>) target(%16 : memref<32xf32, #tpu.memory_space<vmem>>) target_semaphore(%18 : memref<!tpu.dma_semaphore, #tpu.memory_space<semaphore_mem>>)
    %c2_i32 = arith.constant 2 : i32
    %19 = arith.addi %0, %c2_i32 : i32
    %20 = arith.index_cast %19 : i32 to index
    %21 = memref.load %arg1[%20] : memref<16xi32, #tpu.memory_space<smem>>
    %c2_i32_8 = arith.constant 2 : i32
    %c2_i32_9 = arith.constant 2 : i32
    %c0_i32_10 = arith.constant 0 : i32
    %22 = tpu.memref_slice %arg2[%21, %c0_i32_10] : memref<16x32xf32, #tpu.memory_space<any>> -> memref<1x32xf32, #tpu.memory_space<any>>
    %23 = tpu.memref_squeeze %22 : memref<1x32xf32, #tpu.memory_space<any>> -> memref<32xf32, #tpu.memory_space<any>>
    %c0_i32_11 = arith.constant 0 : i32
    %24 = tpu.memref_slice %arg4[%c2_i32_8, %c0_i32_11] : memref<16x32xf32, #tpu.memory_space<vmem>> -> memref<1x32xf32, #tpu.memory_space<vmem>>
    %25 = tpu.memref_squeeze %24 : memref<1x32xf32, #tpu.memory_space<vmem>> -> memref<32xf32, #tpu.memory_space<vmem>>
    %26 = tpu.memref_slice %arg5[%c2_i32_9] : memref<16x!tpu.dma_semaphore, #tpu.memory_space<semaphore_mem>> -> memref<1x!tpu.dma_semaphore, #tpu.memory_space<semaphore_mem>>
    %27 = tpu.memref_squeeze %26 : memref<1x!tpu.dma_semaphore, #tpu.memory_space<semaphore_mem>> -> memref<!tpu.dma_semaphore, #tpu.memory_space<semaphore_mem>>
    tpu.enqueue_dma source(%23 : memref<32xf32, #tpu.memory_space<any>>) target(%25 : memref<32xf32, #tpu.memory_space<vmem>>) target_semaphore(%27 : memref<!tpu.dma_semaphore, #tpu.memory_space<semaphore_mem>>)
    %c3_i32 = arith.constant 3 : i32
    %28 = arith.addi %0, %c3_i32 : i32
    %29 = arith.index_cast %28 : i32 to index
    %30 = memref.load %arg1[%29] : memref<16xi32, #tpu.memory_space<smem>>
    %c3_i32_12 = arith.constant 3 : i32
    %c3_i32_13 = arith.constant 3 : i32
    %c0_i32_14 = arith.constant 0 : i32
    %31 = tpu.memref_slice %arg2[%30, %c0_i32_14] : memref<16x32xf32, #tpu.memory_space<any>> -> memref<1x32xf32, #tpu.memory_space<any>>
    %32 = tpu.memref_squeeze %31 : memref<1x32xf32, #tpu.memory_space<any>> -> memref<32xf32, #tpu.memory_space<any>>
    %c0_i32_15 = arith.constant 0 : i32
    %33 = tpu.memref_slice %arg4[%c3_i32_12, %c0_i32_15] : memref<16x32xf32, #tpu.memory_space<vmem>> -> memref<1x32xf32, #tpu.memory_space<vmem>>
    %34 = tpu.memref_squeeze %33 : memref<1x32xf32, #tpu.memory_space<vmem>> -> memref<32xf32, #tpu.memory_space<vmem>>
    %35 = tpu.memref_slice %arg5[%c3_i32_13] : memref<16x!tpu.dma_semaphore, #tpu.memory_space<semaphore_mem>> -> memref<1x!tpu.dma_semaphore, #tpu.memory_space<semaphore_mem>>
    %36 = tpu.memref_squeeze %35 : memref<1x!tpu.dma_semaphore, #tpu.memory_space<semaphore_mem>> -> memref<!tpu.dma_semaphore, #tpu.memory_space<semaphore_mem>>
    tpu.enqueue_dma source(%32 : memref<32xf32, #tpu.memory_space<any>>) target(%34 : memref<32xf32, #tpu.memory_space<vmem>>) target_semaphore(%36 : memref<!tpu.dma_semaphore, #tpu.memory_space<semaphore_mem>>)
    %c4_i32 = arith.constant 4 : i32
    %37 = arith.addi %0, %c4_i32 : i32
    %38 = arith.index_cast %37 : i32 to index
    %39 = memref.load %arg1[%38] : memref<16xi32, #tpu.memory_space<smem>>
    %c4_i32_16 = arith.constant 4 : i32
    %c4_i32_17 = arith.constant 4 : i32
    %c0_i32_18 = arith.constant 0 : i32
    %40 = tpu.memref_slice %arg2[%39, %c0_i32_18] : memref<16x32xf32, #tpu.memory_space<any>> -> memref<1x32xf32, #tpu.memory_space<any>>
    %41 = tpu.memref_squeeze %40 : memref<1x32xf32, #tpu.memory_space<any>> -> memref<32xf32, #tpu.memory_space<any>>
    %c0_i32_19 = arith.constant 0 : i32
    %42 = tpu.memref_slice %arg4[%c4_i32_16, %c0_i32_19] : memref<16x32xf32, #tpu.memory_space<vmem>> -> memref<1x32xf32, #tpu.memory_space<vmem>>
    %43 = tpu.memref_squeeze %42 : memref<1x32xf32, #tpu.memory_space<vmem>> -> memref<32xf32, #tpu.memory_space<vmem>>
    %44 = tpu.memref_slice %arg5[%c4_i32_17] : memref<16x!tpu.dma_semaphore, #tpu.memory_space<semaphore_mem>> -> memref<1x!tpu.dma_semaphore, #tpu.memory_space<semaphore_mem>>
    %45 = tpu.memref_squeeze %44 : memref<1x!tpu.dma_semaphore, #tpu.memory_space<semaphore_mem>> -> memref<!tpu.dma_semaphore, #tpu.memory_space<semaphore_mem>>
    tpu.enqueue_dma source(%41 : memref<32xf32, #tpu.memory_space<any>>) target(%43 : memref<32xf32, #tpu.memory_space<vmem>>) target_semaphore(%45 : memref<!tpu.dma_semaphore, #tpu.memory_space<semaphore_mem>>)
    %c5_i32 = arith.constant 5 : i32
    %46 = arith.addi %0, %c5_i32 : i32
    %47 = arith.index_cast %46 : i32 to index
    %48 = memref.load %arg1[%47] : memref<16xi32, #tpu.memory_space<smem>>
    %c5_i32_20 = arith.constant 5 : i32
    %c5_i32_21 = arith.constant 5 : i32
    %c0_i32_22 = arith.constant 0 : i32
    %49 = tpu.memref_slice %arg2[%48, %c0_i32_22] : memref<16x32xf32, #tpu.memory_space<any>> -> memref<1x32xf32, #tpu.memory_space<any>>
    %50 = tpu.memref_squeeze %49 : memref<1x32xf32, #tpu.memory_space<any>> -> memref<32xf32, #tpu.memory_space<any>>
    %c0_i32_23 = arith.constant 0 : i32
    %51 = tpu.memref_slice %arg4[%c5_i32_20, %c0_i32_23] : memref<16x32xf32, #tpu.memory_space<vmem>> -> memref<1x32xf32, #tpu.memory_space<vmem>>
    %52 = tpu.memref_squeeze %51 : memref<1x32xf32, #tpu.memory_space<vmem>> -> memref<32xf32, #tpu.memory_space<vmem>>
    %53 = tpu.memref_slice %arg5[%c5_i32_21] : memref<16x!tpu.dma_semaphore, #tpu.memory_space<semaphore_mem>> -> memref<1x!tpu.dma_semaphore, #tpu.memory_space<semaphore_mem>>
    %54 = tpu.memref_squeeze %53 : memref<1x!tpu.dma_semaphore, #tpu.memory_space<semaphore_mem>> -> memref<!tpu.dma_semaphore, #tpu.memory_space<semaphore_mem>>
    tpu.enqueue_dma source(%50 : memref<32xf32, #tpu.memory_space<any>>) target(%52 : memref<32xf32, #tpu.memory_space<vmem>>) target_semaphore(%54 : memref<!tpu.dma_semaphore, #tpu.memory_space<semaphore_mem>>)
    %c6_i32 = arith.constant 6 : i32
    %55 = arith.addi %0, %c6_i32 : i32
    %56 = arith.index_cast %55 : i32 to index
    %57 = memref.load %arg1[%56] : memref<16xi32, #tpu.memory_space<smem>>
    %c6_i32_24 = arith.constant 6 : i32
    %c6_i32_25 = arith.constant 6 : i32
    %c0_i32_26 = arith.constant 0 : i32
    %58 = tpu.memref_slice %arg2[%57, %c0_i32_26] : memref<16x32xf32, #tpu.memory_space<any>> -> memref<1x32xf32, #tpu.memory_space<any>>
    %59 = tpu.memref_squeeze %58 : memref<1x32xf32, #tpu.memory_space<any>> -> memref<32xf32, #tpu.memory_space<any>>
    %c0_i32_27 = arith.constant 0 : i32
    %60 = tpu.memref_slice %arg4[%c6_i32_24, %c0_i32_27] : memref<16x32xf32, #tpu.memory_space<vmem>> -> memref<1x32xf32, #tpu.memory_space<vmem>>
    %61 = tpu.memref_squeeze %60 : memref<1x32xf32, #tpu.memory_space<vmem>> -> memref<32xf32, #tpu.memory_space<vmem>>
    %62 = tpu.memref_slice %arg5[%c6_i32_25] : memref<16x!tpu.dma_semaphore, #tpu.memory_space<semaphore_mem>> -> memref<1x!tpu.dma_semaphore, #tpu.memory_space<semaphore_mem>>
    %63 = tpu.memref_squeeze %62 : memref<1x!tpu.dma_semaphore, #tpu.memory_space<semaphore_mem>> -> memref<!tpu.dma_semaphore, #tpu.memory_space<semaphore_mem>>
    tpu.enqueue_dma source(%59 : memref<32xf32, #tpu.memory_space<any>>) target(%61 : memref<32xf32, #tpu.memory_space<vmem>>) target_semaphore(%63 : memref<!tpu.dma_semaphore, #tpu.memory_space<semaphore_mem>>)
    %c7_i32 = arith.constant 7 : i32
    %64 = arith.addi %0, %c7_i32 : i32
    %65 = arith.index_cast %64 : i32 to index
    %66 = memref.load %arg1[%65] : memref<16xi32, #tpu.memory_space<smem>>
    %c7_i32_28 = arith.constant 7 : i32
    %c7_i32_29 = arith.constant 7 : i32
    %c0_i32_30 = arith.constant 0 : i32
    %67 = tpu.memref_slice %arg2[%66, %c0_i32_30] : memref<16x32xf32, #tpu.memory_space<any>> -> memref<1x32xf32, #tpu.memory_space<any>>
    %68 = tpu.memref_squeeze %67 : memref<1x32xf32, #tpu.memory_space<any>> -> memref<32xf32, #tpu.memory_space<any>>
    %c0_i32_31 = arith.constant 0 : i32
    %69 = tpu.memref_slice %arg4[%c7_i32_28, %c0_i32_31] : memref<16x32xf32, #tpu.memory_space<vmem>> -> memref<1x32xf32, #tpu.memory_space<vmem>>
    %70 = tpu.memref_squeeze %69 : memref<1x32xf32, #tpu.memory_space<vmem>> -> memref<32xf32, #tpu.memory_space<vmem>>
    %71 = tpu.memref_slice %arg5[%c7_i32_29] : memref<16x!tpu.dma_semaphore, #tpu.memory_space<semaphore_mem>> -> memref<1x!tpu.dma_semaphore, #tpu.memory_space<semaphore_mem>>
    %72 = tpu.memref_squeeze %71 : memref<1x!tpu.dma_semaphore, #tpu.memory_space<semaphore_mem>> -> memref<!tpu.dma_semaphore, #tpu.memory_space<semaphore_mem>>
    tpu.enqueue_dma source(%68 : memref<32xf32, #tpu.memory_space<any>>) target(%70 : memref<32xf32, #tpu.memory_space<vmem>>) target_semaphore(%72 : memref<!tpu.dma_semaphore, #tpu.memory_space<semaphore_mem>>)
    %c8_i32 = arith.constant 8 : i32
    %73 = arith.addi %0, %c8_i32 : i32
    %74 = arith.index_cast %73 : i32 to index
    %75 = memref.load %arg1[%74] : memref<16xi32, #tpu.memory_space<smem>>
    %c8_i32_32 = arith.constant 8 : i32
    %c8_i32_33 = arith.constant 8 : i32
    %c0_i32_34 = arith.constant 0 : i32
    %76 = tpu.memref_slice %arg2[%75, %c0_i32_34] : memref<16x32xf32, #tpu.memory_space<any>> -> memref<1x32xf32, #tpu.memory_space<any>>
    %77 = tpu.memref_squeeze %76 : memref<1x32xf32, #tpu.memory_space<any>> -> memref<32xf32, #tpu.memory_space<any>>
    %c0_i32_35 = arith.constant 0 : i32
    %78 = tpu.memref_slice %arg4[%c8_i32_32, %c0_i32_35] : memref<16x32xf32, #tpu.memory_space<vmem>> -> memref<1x32xf32, #tpu.memory_space<vmem>>
    %79 = tpu.memref_squeeze %78 : memref<1x32xf32, #tpu.memory_space<vmem>> -> memref<32xf32, #tpu.memory_space<vmem>>
    %80 = tpu.memref_slice %arg5[%c8_i32_33] : memref<16x!tpu.dma_semaphore, #tpu.memory_space<semaphore_mem>> -> memref<1x!tpu.dma_semaphore, #tpu.memory_space<semaphore_mem>>
    %81 = tpu.memref_squeeze %80 : memref<1x!tpu.dma_semaphore, #tpu.memory_space<semaphore_mem>> -> memref<!tpu.dma_semaphore, #tpu.memory_space<semaphore_mem>>
    tpu.enqueue_dma source(%77 : memref<32xf32, #tpu.memory_space<any>>) target(%79 : memref<32xf32, #tpu.memory_space<vmem>>) target_semaphore(%81 : memref<!tpu.dma_semaphore, #tpu.memory_space<semaphore_mem>>)
    %c9_i32 = arith.constant 9 : i32
    %82 = arith.addi %0, %c9_i32 : i32
    %83 = arith.index_cast %82 : i32 to index
    %84 = memref.load %arg1[%83] : memref<16xi32, #tpu.memory_space<smem>>
    %c9_i32_36 = arith.constant 9 : i32
    %c9_i32_37 = arith.constant 9 : i32
    %c0_i32_38 = arith.constant 0 : i32
    %85 = tpu.memref_slice %arg2[%84, %c0_i32_38] : memref<16x32xf32, #tpu.memory_space<any>> -> memref<1x32xf32, #tpu.memory_space<any>>
    %86 = tpu.memref_squeeze %85 : memref<1x32xf32, #tpu.memory_space<any>> -> memref<32xf32, #tpu.memory_space<any>>
    %c0_i32_39 = arith.constant 0 : i32
    %87 = tpu.memref_slice %arg4[%c9_i32_36, %c0_i32_39] : memref<16x32xf32, #tpu.memory_space<vmem>> -> memref<1x32xf32, #tpu.memory_space<vmem>>
    %88 = tpu.memref_squeeze %87 : memref<1x32xf32, #tpu.memory_space<vmem>> -> memref<32xf32, #tpu.memory_space<vmem>>
    %89 = tpu.memref_slice %arg5[%c9_i32_37] : memref<16x!tpu.dma_semaphore, #tpu.memory_space<semaphore_mem>> -> memref<1x!tpu.dma_semaphore, #tpu.memory_space<semaphore_mem>>
    %90 = tpu.memref_squeeze %89 : memref<1x!tpu.dma_semaphore, #tpu.memory_space<semaphore_mem>> -> memref<!tpu.dma_semaphore, #tpu.memory_space<semaphore_mem>>
    tpu.enqueue_dma source(%86 : memref<32xf32, #tpu.memory_space<any>>) target(%88 : memref<32xf32, #tpu.memory_space<vmem>>) target_semaphore(%90 : memref<!tpu.dma_semaphore, #tpu.memory_space<semaphore_mem>>)
    %c10_i32 = arith.constant 10 : i32
    %91 = arith.addi %0, %c10_i32 : i32
    %92 = arith.index_cast %91 : i32 to index
    %93 = memref.load %arg1[%92] : memref<16xi32, #tpu.memory_space<smem>>
    %c10_i32_40 = arith.constant 10 : i32
    %c10_i32_41 = arith.constant 10 : i32
    %c0_i32_42 = arith.constant 0 : i32
    %94 = tpu.memref_slice %arg2[%93, %c0_i32_42] : memref<16x32xf32, #tpu.memory_space<any>> -> memref<1x32xf32, #tpu.memory_space<any>>
    %95 = tpu.memref_squeeze %94 : memref<1x32xf32, #tpu.memory_space<any>> -> memref<32xf32, #tpu.memory_space<any>>
    %c0_i32_43 = arith.constant 0 : i32
    %96 = tpu.memref_slice %arg4[%c10_i32_40, %c0_i32_43] : memref<16x32xf32, #tpu.memory_space<vmem>> -> memref<1x32xf32, #tpu.memory_space<vmem>>
    %97 = tpu.memref_squeeze %96 : memref<1x32xf32, #tpu.memory_space<vmem>> -> memref<32xf32, #tpu.memory_space<vmem>>
    %98 = tpu.memref_slice %arg5[%c10_i32_41] : memref<16x!tpu.dma_semaphore, #tpu.memory_space<semaphore_mem>> -> memref<1x!tpu.dma_semaphore, #tpu.memory_space<semaphore_mem>>
    %99 = tpu.memref_squeeze %98 : memref<1x!tpu.dma_semaphore, #tpu.memory_space<semaphore_mem>> -> memref<!tpu.dma_semaphore, #tpu.memory_space<semaphore_mem>>
    tpu.enqueue_dma source(%95 : memref<32xf32, #tpu.memory_space<any>>) target(%97 : memref<32xf32, #tpu.memory_space<vmem>>) target_semaphore(%99 : memref<!tpu.dma_semaphore, #tpu.memory_space<semaphore_mem>>)
    %c11_i32 = arith.constant 11 : i32
    %100 = arith.addi %0, %c11_i32 : i32
    %101 = arith.index_cast %100 : i32 to index
    %102 = memref.load %arg1[%101] : memref<16xi32, #tpu.memory_space<smem>>
    %c11_i32_44 = arith.constant 11 : i32
    %c11_i32_45 = arith.constant 11 : i32
    %c0_i32_46 = arith.constant 0 : i32
    %103 = tpu.memref_slice %arg2[%102, %c0_i32_46] : memref<16x32xf32, #tpu.memory_space<any>> -> memref<1x32xf32, #tpu.memory_space<any>>
    %104 = tpu.memref_squeeze %103 : memref<1x32xf32, #tpu.memory_space<any>> -> memref<32xf32, #tpu.memory_space<any>>
    %c0_i32_47 = arith.constant 0 : i32
    %105 = tpu.memref_slice %arg4[%c11_i32_44, %c0_i32_47] : memref<16x32xf32, #tpu.memory_space<vmem>> -> memref<1x32xf32, #tpu.memory_space<vmem>>
    %106 = tpu.memref_squeeze %105 : memref<1x32xf32, #tpu.memory_space<vmem>> -> memref<32xf32, #tpu.memory_space<vmem>>
    %107 = tpu.memref_slice %arg5[%c11_i32_45] : memref<16x!tpu.dma_semaphore, #tpu.memory_space<semaphore_mem>> -> memref<1x!tpu.dma_semaphore, #tpu.memory_space<semaphore_mem>>
    %108 = tpu.memref_squeeze %107 : memref<1x!tpu.dma_semaphore, #tpu.memory_space<semaphore_mem>> -> memref<!tpu.dma_semaphore, #tpu.memory_space<semaphore_mem>>
    tpu.enqueue_dma source(%104 : memref<32xf32, #tpu.memory_space<any>>) target(%106 : memref<32xf32, #tpu.memory_space<vmem>>) target_semaphore(%108 : memref<!tpu.dma_semaphore, #tpu.memory_space<semaphore_mem>>)
    %c12_i32 = arith.constant 12 : i32
    %109 = arith.addi %0, %c12_i32 : i32
    %110 = arith.index_cast %109 : i32 to index
    %111 = memref.load %arg1[%110] : memref<16xi32, #tpu.memory_space<smem>>
    %c12_i32_48 = arith.constant 12 : i32
    %c12_i32_49 = arith.constant 12 : i32
    %c0_i32_50 = arith.constant 0 : i32
    %112 = tpu.memref_slice %arg2[%111, %c0_i32_50] : memref<16x32xf32, #tpu.memory_space<any>> -> memref<1x32xf32, #tpu.memory_space<any>>
    %113 = tpu.memref_squeeze %112 : memref<1x32xf32, #tpu.memory_space<any>> -> memref<32xf32, #tpu.memory_space<any>>
    %c0_i32_51 = arith.constant 0 : i32
    %114 = tpu.memref_slice %arg4[%c12_i32_48, %c0_i32_51] : memref<16x32xf32, #tpu.memory_space<vmem>> -> memref<1x32xf32, #tpu.memory_space<vmem>>
    %115 = tpu.memref_squeeze %114 : memref<1x32xf32, #tpu.memory_space<vmem>> -> memref<32xf32, #tpu.memory_space<vmem>>
    %116 = tpu.memref_slice %arg5[%c12_i32_49] : memref<16x!tpu.dma_semaphore, #tpu.memory_space<semaphore_mem>> -> memref<1x!tpu.dma_semaphore, #tpu.memory_space<semaphore_mem>>
    %117 = tpu.memref_squeeze %116 : memref<1x!tpu.dma_semaphore, #tpu.memory_space<semaphore_mem>> -> memref<!tpu.dma_semaphore, #tpu.memory_space<semaphore_mem>>
    tpu.enqueue_dma source(%113 : memref<32xf32, #tpu.memory_space<any>>) target(%115 : memref<32xf32, #tpu.memory_space<vmem>>) target_semaphore(%117 : memref<!tpu.dma_semaphore, #tpu.memory_space<semaphore_mem>>)
    %c13_i32 = arith.constant 13 : i32
    %118 = arith.addi %0, %c13_i32 : i32
    %119 = arith.index_cast %118 : i32 to index
    %120 = memref.load %arg1[%119] : memref<16xi32, #tpu.memory_space<smem>>
    %c13_i32_52 = arith.constant 13 : i32
    %c13_i32_53 = arith.constant 13 : i32
    %c0_i32_54 = arith.constant 0 : i32
    %121 = tpu.memref_slice %arg2[%120, %c0_i32_54] : memref<16x32xf32, #tpu.memory_space<any>> -> memref<1x32xf32, #tpu.memory_space<any>>
    %122 = tpu.memref_squeeze %121 : memref<1x32xf32, #tpu.memory_space<any>> -> memref<32xf32, #tpu.memory_space<any>>
    %c0_i32_55 = arith.constant 0 : i32
    %123 = tpu.memref_slice %arg4[%c13_i32_52, %c0_i32_55] : memref<16x32xf32, #tpu.memory_space<vmem>> -> memref<1x32xf32, #tpu.memory_space<vmem>>
    %124 = tpu.memref_squeeze %123 : memref<1x32xf32, #tpu.memory_space<vmem>> -> memref<32xf32, #tpu.memory_space<vmem>>
    %125 = tpu.memref_slice %arg5[%c13_i32_53] : memref<16x!tpu.dma_semaphore, #tpu.memory_space<semaphore_mem>> -> memref<1x!tpu.dma_semaphore, #tpu.memory_space<semaphore_mem>>
    %126 = tpu.memref_squeeze %125 : memref<1x!tpu.dma_semaphore, #tpu.memory_space<semaphore_mem>> -> memref<!tpu.dma_semaphore, #tpu.memory_space<semaphore_mem>>
    tpu.enqueue_dma source(%122 : memref<32xf32, #tpu.memory_space<any>>) target(%124 : memref<32xf32, #tpu.memory_space<vmem>>) target_semaphore(%126 : memref<!tpu.dma_semaphore, #tpu.memory_space<semaphore_mem>>)
    %c14_i32 = arith.constant 14 : i32
    %127 = arith.addi %0, %c14_i32 : i32
    %128 = arith.index_cast %127 : i32 to index
    %129 = memref.load %arg1[%128] : memref<16xi32, #tpu.memory_space<smem>>
    %c14_i32_56 = arith.constant 14 : i32
    %c14_i32_57 = arith.constant 14 : i32
    %c0_i32_58 = arith.constant 0 : i32
    %130 = tpu.memref_slice %arg2[%129, %c0_i32_58] : memref<16x32xf32, #tpu.memory_space<any>> -> memref<1x32xf32, #tpu.memory_space<any>>
    %131 = tpu.memref_squeeze %130 : memref<1x32xf32, #tpu.memory_space<any>> -> memref<32xf32, #tpu.memory_space<any>>
    %c0_i32_59 = arith.constant 0 : i32
    %132 = tpu.memref_slice %arg4[%c14_i32_56, %c0_i32_59] : memref<16x32xf32, #tpu.memory_space<vmem>> -> memref<1x32xf32, #tpu.memory_space<vmem>>
    %133 = tpu.memref_squeeze %132 : memref<1x32xf32, #tpu.memory_space<vmem>> -> memref<32xf32, #tpu.memory_space<vmem>>
    %134 = tpu.memref_slice %arg5[%c14_i32_57] : memref<16x!tpu.dma_semaphore, #tpu.memory_space<semaphore_mem>> -> memref<1x!tpu.dma_semaphore, #tpu.memory_space<semaphore_mem>>
    %135 = tpu.memref_squeeze %134 : memref<1x!tpu.dma_semaphore, #tpu.memory_space<semaphore_mem>> -> memref<!tpu.dma_semaphore, #tpu.memory_space<semaphore_mem>>
    tpu.enqueue_dma source(%131 : memref<32xf32, #tpu.memory_space<any>>) target(%133 : memref<32xf32, #tpu.memory_space<vmem>>) target_semaphore(%135 : memref<!tpu.dma_semaphore, #tpu.memory_space<semaphore_mem>>)
    %c15_i32 = arith.constant 15 : i32
    %136 = arith.addi %0, %c15_i32 : i32
    %137 = arith.index_cast %136 : i32 to index
    %138 = memref.load %arg1[%137] : memref<16xi32, #tpu.memory_space<smem>>
    %c15_i32_60 = arith.constant 15 : i32
    %c15_i32_61 = arith.constant 15 : i32
    %c0_i32_62 = arith.constant 0 : i32
    %139 = tpu.memref_slice %arg2[%138, %c0_i32_62] : memref<16x32xf32, #tpu.memory_space<any>> -> memref<1x32xf32, #tpu.memory_space<any>>
    %140 = tpu.memref_squeeze %139 : memref<1x32xf32, #tpu.memory_space<any>> -> memref<32xf32, #tpu.memory_space<any>>
    %c0_i32_63 = arith.constant 0 : i32
    %141 = tpu.memref_slice %arg4[%c15_i32_60, %c0_i32_63] : memref<16x32xf32, #tpu.memory_space<vmem>> -> memref<1x32xf32, #tpu.memory_space<vmem>>
    %142 = tpu.memref_squeeze %141 : memref<1x32xf32, #tpu.memory_space<vmem>> -> memref<32xf32, #tpu.memory_space<vmem>>
    %143 = tpu.memref_slice %arg5[%c15_i32_61] : memref<16x!tpu.dma_semaphore, #tpu.memory_space<semaphore_mem>> -> memref<1x!tpu.dma_semaphore, #tpu.memory_space<semaphore_mem>>
    %144 = tpu.memref_squeeze %143 : memref<1x!tpu.dma_semaphore, #tpu.memory_space<semaphore_mem>> -> memref<!tpu.dma_semaphore, #tpu.memory_space<semaphore_mem>>
    tpu.enqueue_dma source(%140 : memref<32xf32, #tpu.memory_space<any>>) target(%142 : memref<32xf32, #tpu.memory_space<vmem>>) target_semaphore(%144 : memref<!tpu.dma_semaphore, #tpu.memory_space<semaphore_mem>>)
    %c0_i32_64 = arith.constant 0 : i32
    %c0_i32_65 = arith.constant 0 : i32
    %c0_i32_66 = arith.constant 0 : i32
    %145 = tpu.memref_slice %arg2[%3, %c0_i32_66] : memref<16x32xf32, #tpu.memory_space<any>> -> memref<1x32xf32, #tpu.memory_space<any>>
    %146 = tpu.memref_squeeze %145 : memref<1x32xf32, #tpu.memory_space<any>> -> memref<32xf32, #tpu.memory_space<any>>
    %c0_i32_67 = arith.constant 0 : i32
    %147 = tpu.memref_slice %arg4[%c0_i32_64, %c0_i32_67] : memref<16x32xf32, #tpu.memory_space<vmem>> -> memref<1x32xf32, #tpu.memory_space<vmem>>
    %148 = tpu.memref_squeeze %147 : memref<1x32xf32, #tpu.memory_space<vmem>> -> memref<32xf32, #tpu.memory_space<vmem>>
    %149 = tpu.memref_slice %arg5[%c0_i32_65] : memref<16x!tpu.dma_semaphore, #tpu.memory_space<semaphore_mem>> -> memref<1x!tpu.dma_semaphore, #tpu.memory_space<semaphore_mem>>
    %150 = tpu.memref_squeeze %149 : memref<1x!tpu.dma_semaphore, #tpu.memory_space<semaphore_mem>> -> memref<!tpu.dma_semaphore, #tpu.memory_space<semaphore_mem>>
    tpu.wait_dma2 semaphore(%150 : memref<!tpu.dma_semaphore, #tpu.memory_space<semaphore_mem>>) src(%146 : memref<32xf32, #tpu.memory_space<any>>) dst(%148 : memref<32xf32, #tpu.memory_space<vmem>>)
    %c1_i32_68 = arith.constant 1 : i32
    %c1_i32_69 = arith.constant 1 : i32
    %c0_i32_70 = arith.constant 0 : i32
    %151 = tpu.memref_slice %arg2[%12, %c0_i32_70] : memref<16x32xf32, #tpu.memory_space<any>> -> memref<1x32xf32, #tpu.memory_space<any>>
    %152 = tpu.memref_squeeze %151 : memref<1x32xf32, #tpu.memory_space<any>> -> memref<32xf32, #tpu.memory_space<any>>
    %c0_i32_71 = arith.constant 0 : i32
    %153 = tpu.memref_slice %arg4[%c1_i32_68, %c0_i32_71] : memref<16x32xf32, #tpu.memory_space<vmem>> -> memref<1x32xf32, #tpu.memory_space<vmem>>
    %154 = tpu.memref_squeeze %153 : memref<1x32xf32, #tpu.memory_space<vmem>> -> memref<32xf32, #tpu.memory_space<vmem>>
    %155 = tpu.memref_slice %arg5[%c1_i32_69] : memref<16x!tpu.dma_semaphore, #tpu.memory_space<semaphore_mem>> -> memref<1x!tpu.dma_semaphore, #tpu.memory_space<semaphore_mem>>
    %156 = tpu.memref_squeeze %155 : memref<1x!tpu.dma_semaphore, #tpu.memory_space<semaphore_mem>> -> memref<!tpu.dma_semaphore, #tpu.memory_space<semaphore_mem>>
    tpu.wait_dma2 semaphore(%156 : memref<!tpu.dma_semaphore, #tpu.memory_space<semaphore_mem>>) src(%152 : memref<32xf32, #tpu.memory_space<any>>) dst(%154 : memref<32xf32, #tpu.memory_space<vmem>>)
    %c2_i32_72 = arith.constant 2 : i32
    %c2_i32_73 = arith.constant 2 : i32
    %c0_i32_74 = arith.constant 0 : i32
    %157 = tpu.memref_slice %arg2[%21, %c0_i32_74] : memref<16x32xf32, #tpu.memory_space<any>> -> memref<1x32xf32, #tpu.memory_space<any>>
    %158 = tpu.memref_squeeze %157 : memref<1x32xf32, #tpu.memory_space<any>> -> memref<32xf32, #tpu.memory_space<any>>
    %c0_i32_75 = arith.constant 0 : i32
    %159 = tpu.memref_slice %arg4[%c2_i32_72, %c0_i32_75] : memref<16x32xf32, #tpu.memory_space<vmem>> -> memref<1x32xf32, #tpu.memory_space<vmem>>
    %160 = tpu.memref_squeeze %159 : memref<1x32xf32, #tpu.memory_space<vmem>> -> memref<32xf32, #tpu.memory_space<vmem>>
    %161 = tpu.memref_slice %arg5[%c2_i32_73] : memref<16x!tpu.dma_semaphore, #tpu.memory_space<semaphore_mem>> -> memref<1x!tpu.dma_semaphore, #tpu.memory_space<semaphore_mem>>
    %162 = tpu.memref_squeeze %161 : memref<1x!tpu.dma_semaphore, #tpu.memory_space<semaphore_mem>> -> memref<!tpu.dma_semaphore, #tpu.memory_space<semaphore_mem>>
    tpu.wait_dma2 semaphore(%162 : memref<!tpu.dma_semaphore, #tpu.memory_space<semaphore_mem>>) src(%158 : memref<32xf32, #tpu.memory_space<any>>) dst(%160 : memref<32xf32, #tpu.memory_space<vmem>>)
    %c3_i32_76 = arith.constant 3 : i32
    %c3_i32_77 = arith.constant 3 : i32
    %c0_i32_78 = arith.constant 0 : i32
    %163 = tpu.memref_slice %arg2[%30, %c0_i32_78] : memref<16x32xf32, #tpu.memory_space<any>> -> memref<1x32xf32, #tpu.memory_space<any>>
    %164 = tpu.memref_squeeze %163 : memref<1x32xf32, #tpu.memory_space<any>> -> memref<32xf32, #tpu.memory_space<any>>
    %c0_i32_79 = arith.constant 0 : i32
    %165 = tpu.memref_slice %arg4[%c3_i32_76, %c0_i32_79] : memref<16x32xf32, #tpu.memory_space<vmem>> -> memref<1x32xf32, #tpu.memory_space<vmem>>
    %166 = tpu.memref_squeeze %165 : memref<1x32xf32, #tpu.memory_space<vmem>> -> memref<32xf32, #tpu.memory_space<vmem>>
    %167 = tpu.memref_slice %arg5[%c3_i32_77] : memref<16x!tpu.dma_semaphore, #tpu.memory_space<semaphore_mem>> -> memref<1x!tpu.dma_semaphore, #tpu.memory_space<semaphore_mem>>
    %168 = tpu.memref_squeeze %167 : memref<1x!tpu.dma_semaphore, #tpu.memory_space<semaphore_mem>> -> memref<!tpu.dma_semaphore, #tpu.memory_space<semaphore_mem>>
    tpu.wait_dma2 semaphore(%168 : memref<!tpu.dma_semaphore, #tpu.memory_space<semaphore_mem>>) src(%164 : memref<32xf32, #tpu.memory_space<any>>) dst(%166 : memref<32xf32, #tpu.memory_space<vmem>>)
    %c4_i32_80 = arith.constant 4 : i32
    %c4_i32_81 = arith.constant 4 : i32
    %c0_i32_82 = arith.constant 0 : i32
    %169 = tpu.memref_slice %arg2[%39, %c0_i32_82] : memref<16x32xf32, #tpu.memory_space<any>> -> memref<1x32xf32, #tpu.memory_space<any>>
    %170 = tpu.memref_squeeze %169 : memref<1x32xf32, #tpu.memory_space<any>> -> memref<32xf32, #tpu.memory_space<any>>
    %c0_i32_83 = arith.constant 0 : i32
    %171 = tpu.memref_slice %arg4[%c4_i32_80, %c0_i32_83] : memref<16x32xf32, #tpu.memory_space<vmem>> -> memref<1x32xf32, #tpu.memory_space<vmem>>
    %172 = tpu.memref_squeeze %171 : memref<1x32xf32, #tpu.memory_space<vmem>> -> memref<32xf32, #tpu.memory_space<vmem>>
    %173 = tpu.memref_slice %arg5[%c4_i32_81] : memref<16x!tpu.dma_semaphore, #tpu.memory_space<semaphore_mem>> -> memref<1x!tpu.dma_semaphore, #tpu.memory_space<semaphore_mem>>
    %174 = tpu.memref_squeeze %173 : memref<1x!tpu.dma_semaphore, #tpu.memory_space<semaphore_mem>> -> memref<!tpu.dma_semaphore, #tpu.memory_space<semaphore_mem>>
    tpu.wait_dma2 semaphore(%174 : memref<!tpu.dma_semaphore, #tpu.memory_space<semaphore_mem>>) src(%170 : memref<32xf32, #tpu.memory_space<any>>) dst(%172 : memref<32xf32, #tpu.memory_space<vmem>>)
    %c5_i32_84 = arith.constant 5 : i32
    %c5_i32_85 = arith.constant 5 : i32
    %c0_i32_86 = arith.constant 0 : i32
    %175 = tpu.memref_slice %arg2[%48, %c0_i32_86] : memref<16x32xf32, #tpu.memory_space<any>> -> memref<1x32xf32, #tpu.memory_space<any>>
    %176 = tpu.memref_squeeze %175 : memref<1x32xf32, #tpu.memory_space<any>> -> memref<32xf32, #tpu.memory_space<any>>
    %c0_i32_87 = arith.constant 0 : i32
    %177 = tpu.memref_slice %arg4[%c5_i32_84, %c0_i32_87] : memref<16x32xf32, #tpu.memory_space<vmem>> -> memref<1x32xf32, #tpu.memory_space<vmem>>
    %178 = tpu.memref_squeeze %177 : memref<1x32xf32, #tpu.memory_space<vmem>> -> memref<32xf32, #tpu.memory_space<vmem>>
    %179 = tpu.memref_slice %arg5[%c5_i32_85] : memref<16x!tpu.dma_semaphore, #tpu.memory_space<semaphore_mem>> -> memref<1x!tpu.dma_semaphore, #tpu.memory_space<semaphore_mem>>
    %180 = tpu.memref_squeeze %179 : memref<1x!tpu.dma_semaphore, #tpu.memory_space<semaphore_mem>> -> memref<!tpu.dma_semaphore, #tpu.memory_space<semaphore_mem>>
    tpu.wait_dma2 semaphore(%180 : memref<!tpu.dma_semaphore, #tpu.memory_space<semaphore_mem>>) src(%176 : memref<32xf32, #tpu.memory_space<any>>) dst(%178 : memref<32xf32, #tpu.memory_space<vmem>>)
    %c6_i32_88 = arith.constant 6 : i32
    %c6_i32_89 = arith.constant 6 : i32
    %c0_i32_90 = arith.constant 0 : i32
    %181 = tpu.memref_slice %arg2[%57, %c0_i32_90] : memref<16x32xf32, #tpu.memory_space<any>> -> memref<1x32xf32, #tpu.memory_space<any>>
    %182 = tpu.memref_squeeze %181 : memref<1x32xf32, #tpu.memory_space<any>> -> memref<32xf32, #tpu.memory_space<any>>
    %c0_i32_91 = arith.constant 0 : i32
    %183 = tpu.memref_slice %arg4[%c6_i32_88, %c0_i32_91] : memref<16x32xf32, #tpu.memory_space<vmem>> -> memref<1x32xf32, #tpu.memory_space<vmem>>
    %184 = tpu.memref_squeeze %183 : memref<1x32xf32, #tpu.memory_space<vmem>> -> memref<32xf32, #tpu.memory_space<vmem>>
    %185 = tpu.memref_slice %arg5[%c6_i32_89] : memref<16x!tpu.dma_semaphore, #tpu.memory_space<semaphore_mem>> -> memref<1x!tpu.dma_semaphore, #tpu.memory_space<semaphore_mem>>
    %186 = tpu.memref_squeeze %185 : memref<1x!tpu.dma_semaphore, #tpu.memory_space<semaphore_mem>> -> memref<!tpu.dma_semaphore, #tpu.memory_space<semaphore_mem>>
    tpu.wait_dma2 semaphore(%186 : memref<!tpu.dma_semaphore, #tpu.memory_space<semaphore_mem>>) src(%182 : memref<32xf32, #tpu.memory_space<any>>) dst(%184 : memref<32xf32, #tpu.memory_space<vmem>>)
    %c7_i32_92 = arith.constant 7 : i32
    %c7_i32_93 = arith.constant 7 : i32
    %c0_i32_94 = arith.constant 0 : i32
    %187 = tpu.memref_slice %arg2[%66, %c0_i32_94] : memref<16x32xf32, #tpu.memory_space<any>> -> memref<1x32xf32, #tpu.memory_space<any>>
    %188 = tpu.memref_squeeze %187 : memref<1x32xf32, #tpu.memory_space<any>> -> memref<32xf32, #tpu.memory_space<any>>
    %c0_i32_95 = arith.constant 0 : i32
    %189 = tpu.memref_slice %arg4[%c7_i32_92, %c0_i32_95] : memref<16x32xf32, #tpu.memory_space<vmem>> -> memref<1x32xf32, #tpu.memory_space<vmem>>
    %190 = tpu.memref_squeeze %189 : memref<1x32xf32, #tpu.memory_space<vmem>> -> memref<32xf32, #tpu.memory_space<vmem>>
    %191 = tpu.memref_slice %arg5[%c7_i32_93] : memref<16x!tpu.dma_semaphore, #tpu.memory_space<semaphore_mem>> -> memref<1x!tpu.dma_semaphore, #tpu.memory_space<semaphore_mem>>
    %192 = tpu.memref_squeeze %191 : memref<1x!tpu.dma_semaphore, #tpu.memory_space<semaphore_mem>> -> memref<!tpu.dma_semaphore, #tpu.memory_space<semaphore_mem>>
    tpu.wait_dma2 semaphore(%192 : memref<!tpu.dma_semaphore, #tpu.memory_space<semaphore_mem>>) src(%188 : memref<32xf32, #tpu.memory_space<any>>) dst(%190 : memref<32xf32, #tpu.memory_space<vmem>>)
    %c8_i32_96 = arith.constant 8 : i32
    %c8_i32_97 = arith.constant 8 : i32
    %c0_i32_98 = arith.constant 0 : i32
    %193 = tpu.memref_slice %arg2[%75, %c0_i32_98] : memref<16x32xf32, #tpu.memory_space<any>> -> memref<1x32xf32, #tpu.memory_space<any>>
    %194 = tpu.memref_squeeze %193 : memref<1x32xf32, #tpu.memory_space<any>> -> memref<32xf32, #tpu.memory_space<any>>
    %c0_i32_99 = arith.constant 0 : i32
    %195 = tpu.memref_slice %arg4[%c8_i32_96, %c0_i32_99] : memref<16x32xf32, #tpu.memory_space<vmem>> -> memref<1x32xf32, #tpu.memory_space<vmem>>
    %196 = tpu.memref_squeeze %195 : memref<1x32xf32, #tpu.memory_space<vmem>> -> memref<32xf32, #tpu.memory_space<vmem>>
    %197 = tpu.memref_slice %arg5[%c8_i32_97] : memref<16x!tpu.dma_semaphore, #tpu.memory_space<semaphore_mem>> -> memref<1x!tpu.dma_semaphore, #tpu.memory_space<semaphore_mem>>
    %198 = tpu.memref_squeeze %197 : memref<1x!tpu.dma_semaphore, #tpu.memory_space<semaphore_mem>> -> memref<!tpu.dma_semaphore, #tpu.memory_space<semaphore_mem>>
    tpu.wait_dma2 semaphore(%198 : memref<!tpu.dma_semaphore, #tpu.memory_space<semaphore_mem>>) src(%194 : memref<32xf32, #tpu.memory_space<any>>) dst(%196 : memref<32xf32, #tpu.memory_space<vmem>>)
    %c9_i32_100 = arith.constant 9 : i32
    %c9_i32_101 = arith.constant 9 : i32
    %c0_i32_102 = arith.constant 0 : i32
    %199 = tpu.memref_slice %arg2[%84, %c0_i32_102] : memref<16x32xf32, #tpu.memory_space<any>> -> memref<1x32xf32, #tpu.memory_space<any>>
    %200 = tpu.memref_squeeze %199 : memref<1x32xf32, #tpu.memory_space<any>> -> memref<32xf32, #tpu.memory_space<any>>
    %c0_i32_103 = arith.constant 0 : i32
    %201 = tpu.memref_slice %arg4[%c9_i32_100, %c0_i32_103] : memref<16x32xf32, #tpu.memory_space<vmem>> -> memref<1x32xf32, #tpu.memory_space<vmem>>
    %202 = tpu.memref_squeeze %201 : memref<1x32xf32, #tpu.memory_space<vmem>> -> memref<32xf32, #tpu.memory_space<vmem>>
    %203 = tpu.memref_slice %arg5[%c9_i32_101] : memref<16x!tpu.dma_semaphore, #tpu.memory_space<semaphore_mem>> -> memref<1x!tpu.dma_semaphore, #tpu.memory_space<semaphore_mem>>
    %204 = tpu.memref_squeeze %203 : memref<1x!tpu.dma_semaphore, #tpu.memory_space<semaphore_mem>> -> memref<!tpu.dma_semaphore, #tpu.memory_space<semaphore_mem>>
    tpu.wait_dma2 semaphore(%204 : memref<!tpu.dma_semaphore, #tpu.memory_space<semaphore_mem>>) src(%200 : memref<32xf32, #tpu.memory_space<any>>) dst(%202 : memref<32xf32, #tpu.memory_space<vmem>>)
    %c10_i32_104 = arith.constant 10 : i32
    %c10_i32_105 = arith.constant 10 : i32
    %c0_i32_106 = arith.constant 0 : i32
    %205 = tpu.memref_slice %arg2[%93, %c0_i32_106] : memref<16x32xf32, #tpu.memory_space<any>> -> memref<1x32xf32, #tpu.memory_space<any>>
    %206 = tpu.memref_squeeze %205 : memref<1x32xf32, #tpu.memory_space<any>> -> memref<32xf32, #tpu.memory_space<any>>
    %c0_i32_107 = arith.constant 0 : i32
    %207 = tpu.memref_slice %arg4[%c10_i32_104, %c0_i32_107] : memref<16x32xf32, #tpu.memory_space<vmem>> -> memref<1x32xf32, #tpu.memory_space<vmem>>
    %208 = tpu.memref_squeeze %207 : memref<1x32xf32, #tpu.memory_space<vmem>> -> memref<32xf32, #tpu.memory_space<vmem>>
    %209 = tpu.memref_slice %arg5[%c10_i32_105] : memref<16x!tpu.dma_semaphore, #tpu.memory_space<semaphore_mem>> -> memref<1x!tpu.dma_semaphore, #tpu.memory_space<semaphore_mem>>
    %210 = tpu.memref_squeeze %209 : memref<1x!tpu.dma_semaphore, #tpu.memory_space<semaphore_mem>> -> memref<!tpu.dma_semaphore, #tpu.memory_space<semaphore_mem>>
    tpu.wait_dma2 semaphore(%210 : memref<!tpu.dma_semaphore, #tpu.memory_space<semaphore_mem>>) src(%206 : memref<32xf32, #tpu.memory_space<any>>) dst(%208 : memref<32xf32, #tpu.memory_space<vmem>>)
    %c11_i32_108 = arith.constant 11 : i32
    %c11_i32_109 = arith.constant 11 : i32
    %c0_i32_110 = arith.constant 0 : i32
    %211 = tpu.memref_slice %arg2[%102, %c0_i32_110] : memref<16x32xf32, #tpu.memory_space<any>> -> memref<1x32xf32, #tpu.memory_space<any>>
    %212 = tpu.memref_squeeze %211 : memref<1x32xf32, #tpu.memory_space<any>> -> memref<32xf32, #tpu.memory_space<any>>
    %c0_i32_111 = arith.constant 0 : i32
    %213 = tpu.memref_slice %arg4[%c11_i32_108, %c0_i32_111] : memref<16x32xf32, #tpu.memory_space<vmem>> -> memref<1x32xf32, #tpu.memory_space<vmem>>
    %214 = tpu.memref_squeeze %213 : memref<1x32xf32, #tpu.memory_space<vmem>> -> memref<32xf32, #tpu.memory_space<vmem>>
    %215 = tpu.memref_slice %arg5[%c11_i32_109] : memref<16x!tpu.dma_semaphore, #tpu.memory_space<semaphore_mem>> -> memref<1x!tpu.dma_semaphore, #tpu.memory_space<semaphore_mem>>
    %216 = tpu.memref_squeeze %215 : memref<1x!tpu.dma_semaphore, #tpu.memory_space<semaphore_mem>> -> memref<!tpu.dma_semaphore, #tpu.memory_space<semaphore_mem>>
    tpu.wait_dma2 semaphore(%216 : memref<!tpu.dma_semaphore, #tpu.memory_space<semaphore_mem>>) src(%212 : memref<32xf32, #tpu.memory_space<any>>) dst(%214 : memref<32xf32, #tpu.memory_space<vmem>>)
    %c12_i32_112 = arith.constant 12 : i32
    %c12_i32_113 = arith.constant 12 : i32
    %c0_i32_114 = arith.constant 0 : i32
    %217 = tpu.memref_slice %arg2[%111, %c0_i32_114] : memref<16x32xf32, #tpu.memory_space<any>> -> memref<1x32xf32, #tpu.memory_space<any>>
    %218 = tpu.memref_squeeze %217 : memref<1x32xf32, #tpu.memory_space<any>> -> memref<32xf32, #tpu.memory_space<any>>
    %c0_i32_115 = arith.constant 0 : i32
    %219 = tpu.memref_slice %arg4[%c12_i32_112, %c0_i32_115] : memref<16x32xf32, #tpu.memory_space<vmem>> -> memref<1x32xf32, #tpu.memory_space<vmem>>
    %220 = tpu.memref_squeeze %219 : memref<1x32xf32, #tpu.memory_space<vmem>> -> memref<32xf32, #tpu.memory_space<vmem>>
    %221 = tpu.memref_slice %arg5[%c12_i32_113] : memref<16x!tpu.dma_semaphore, #tpu.memory_space<semaphore_mem>> -> memref<1x!tpu.dma_semaphore, #tpu.memory_space<semaphore_mem>>
    %222 = tpu.memref_squeeze %221 : memref<1x!tpu.dma_semaphore, #tpu.memory_space<semaphore_mem>> -> memref<!tpu.dma_semaphore, #tpu.memory_space<semaphore_mem>>
    tpu.wait_dma2 semaphore(%222 : memref<!tpu.dma_semaphore, #tpu.memory_space<semaphore_mem>>) src(%218 : memref<32xf32, #tpu.memory_space<any>>) dst(%220 : memref<32xf32, #tpu.memory_space<vmem>>)
    %c13_i32_116 = arith.constant 13 : i32
    %c13_i32_117 = arith.constant 13 : i32
    %c0_i32_118 = arith.constant 0 : i32
    %223 = tpu.memref_slice %arg2[%120, %c0_i32_118] : memref<16x32xf32, #tpu.memory_space<any>> -> memref<1x32xf32, #tpu.memory_space<any>>
    %224 = tpu.memref_squeeze %223 : memref<1x32xf32, #tpu.memory_space<any>> -> memref<32xf32, #tpu.memory_space<any>>
    %c0_i32_119 = arith.constant 0 : i32
    %225 = tpu.memref_slice %arg4[%c13_i32_116, %c0_i32_119] : memref<16x32xf32, #tpu.memory_space<vmem>> -> memref<1x32xf32, #tpu.memory_space<vmem>>
    %226 = tpu.memref_squeeze %225 : memref<1x32xf32, #tpu.memory_space<vmem>> -> memref<32xf32, #tpu.memory_space<vmem>>
    %227 = tpu.memref_slice %arg5[%c13_i32_117] : memref<16x!tpu.dma_semaphore, #tpu.memory_space<semaphore_mem>> -> memref<1x!tpu.dma_semaphore, #tpu.memory_space<semaphore_mem>>
    %228 = tpu.memref_squeeze %227 : memref<1x!tpu.dma_semaphore, #tpu.memory_space<semaphore_mem>> -> memref<!tpu.dma_semaphore, #tpu.memory_space<semaphore_mem>>
    tpu.wait_dma2 semaphore(%228 : memref<!tpu.dma_semaphore, #tpu.memory_space<semaphore_mem>>) src(%224 : memref<32xf32, #tpu.memory_space<any>>) dst(%226 : memref<32xf32, #tpu.memory_space<vmem>>)
    %c14_i32_120 = arith.constant 14 : i32
    %c14_i32_121 = arith.constant 14 : i32
    %c0_i32_122 = arith.constant 0 : i32
    %229 = tpu.memref_slice %arg2[%129, %c0_i32_122] : memref<16x32xf32, #tpu.memory_space<any>> -> memref<1x32xf32, #tpu.memory_space<any>>
    %230 = tpu.memref_squeeze %229 : memref<1x32xf32, #tpu.memory_space<any>> -> memref<32xf32, #tpu.memory_space<any>>
    %c0_i32_123 = arith.constant 0 : i32
    %231 = tpu.memref_slice %arg4[%c14_i32_120, %c0_i32_123] : memref<16x32xf32, #tpu.memory_space<vmem>> -> memref<1x32xf32, #tpu.memory_space<vmem>>
    %232 = tpu.memref_squeeze %231 : memref<1x32xf32, #tpu.memory_space<vmem>> -> memref<32xf32, #tpu.memory_space<vmem>>
    %233 = tpu.memref_slice %arg5[%c14_i32_121] : memref<16x!tpu.dma_semaphore, #tpu.memory_space<semaphore_mem>> -> memref<1x!tpu.dma_semaphore, #tpu.memory_space<semaphore_mem>>
    %234 = tpu.memref_squeeze %233 : memref<1x!tpu.dma_semaphore, #tpu.memory_space<semaphore_mem>> -> memref<!tpu.dma_semaphore, #tpu.memory_space<semaphore_mem>>
    tpu.wait_dma2 semaphore(%234 : memref<!tpu.dma_semaphore, #tpu.memory_space<semaphore_mem>>) src(%230 : memref<32xf32, #tpu.memory_space<any>>) dst(%232 : memref<32xf32, #tpu.memory_space<vmem>>)
    %c15_i32_124 = arith.constant 15 : i32
    %c15_i32_125 = arith.constant 15 : i32
    %c0_i32_126 = arith.constant 0 : i32
    %235 = tpu.memref_slice %arg2[%138, %c0_i32_126] : memref<16x32xf32, #tpu.memory_space<any>> -> memref<1x32xf32, #tpu.memory_space<any>>
    %236 = tpu.memref_squeeze %235 : memref<1x32xf32, #tpu.memory_space<any>> -> memref<32xf32, #tpu.memory_space<any>>
    %c0_i32_127 = arith.constant 0 : i32
    %237 = tpu.memref_slice %arg4[%c15_i32_124, %c0_i32_127] : memref<16x32xf32, #tpu.memory_space<vmem>> -> memref<1x32xf32, #tpu.memory_space<vmem>>
    %238 = tpu.memref_squeeze %237 : memref<1x32xf32, #tpu.memory_space<vmem>> -> memref<32xf32, #tpu.memory_space<vmem>>
    %239 = tpu.memref_slice %arg5[%c15_i32_125] : memref<16x!tpu.dma_semaphore, #tpu.memory_space<semaphore_mem>> -> memref<1x!tpu.dma_semaphore, #tpu.memory_space<semaphore_mem>>
    %240 = tpu.memref_squeeze %239 : memref<1x!tpu.dma_semaphore, #tpu.memory_space<semaphore_mem>> -> memref<!tpu.dma_semaphore, #tpu.memory_space<semaphore_mem>>
    tpu.wait_dma2 semaphore(%240 : memref<!tpu.dma_semaphore, #tpu.memory_space<semaphore_mem>>) src(%236 : memref<32xf32, #tpu.memory_space<any>>) dst(%238 : memref<32xf32, #tpu.memory_space<vmem>>)
    %c0 = arith.constant 0 : index
    %c0_128 = arith.constant 0 : index
    %241 = vector.load %arg4[%c0, %c0_128] : memref<16x32xf32, #tpu.memory_space<vmem>>, vector<16x32xf32>
    %c0_129 = arith.constant 0 : index
    %c0_130 = arith.constant 0 : index
    %242 = vector.load %arg3[%c0_129, %c0_130] : memref<16x32xf32, #tpu.memory_space<vmem>>, vector<16x32xf32>
    tpu.vector_store %arg3[%c0_129, %c0_130], %241 {strides = array<i32>} : memref<16x32xf32, #tpu.memory_space<vmem>>, vector<16x32xf32>,
    return
  }
  func.func @transform_1(%arg0: i32, %arg1: memref<16xi32, #tpu.memory_space<smem>>) -> (i32, i32) {
    %c0_i32 = arith.constant 0 : i32
    %c0_i32_0 = arith.constant 0 : i32
    return %arg0, %c0_i32 : i32, i32
  }
}

</mosaic_0001>

<llo_original>
// kernel: tpu_custom_call.1
$region0: #{tpu_custom_call.1}
  #allocation0 [shape = 'u32[]', space=smem, size = 0x4, offset = 0x4, fixed_abs, tag = 'smem constant byte address 0x4 - core index']
  #allocation1 [shape = 'u32[144,128]{1,0:T(1,128)}', space=vmem, size = 0x12000, scoped, tag = 'internal scratch']
  #allocation2 [shape = 'f32[16,32]{1,0:T(8,128)}', space=vmem, size = 0x2000, scoped, tag = 'scratch operand']
  #allocation3 [shape = 's32[16]{0}', space=sflag, size = 0x40, scoped, tag = 'scratch operand']
  #allocation4 [shape = 's32[1]{0}', space=sflag, size = 0x4, scoped, tag = 'scoped memory for tpu_custom_call.1']
  #allocation5 [shape = 'u8[512]{0}', space=smem, size = 0x200, scoped, tag = 'prefetched SMEM operand 0']
  #allocation8 [shape = 's32[]', space=sflag, size = 0x4, offset = 0, fixed_abs, tag = 'sflag constant byte address 0x0 - dummy sync flag']
  #allocation9 [shape = 's32[]', space=sflag, size = 0x4, offset = 0, fixed_abs, tag = 'sflag constant byte address 0x0 - dummy sync flag']
  #allocation10 [shape = 'u32[]', space=smem, size = 0x4, offset = 0x44, fixed_abs, tag = 'smem constant byte address 0x44 - assertion arg 0']
  #allocation11 [shape = 'u32[]', space=smem, size = 0x4, offset = 0x48, fixed_abs, tag = 'smem constant byte address 0x48 - assertion arg 1']
  #allocation12 [shape = 's32[]', space=sflag, size = 0x4, offset = 0, fixed_abs, tag = 'sflag constant byte address 0x0 - dummy sync flag']
  #allocation13 [shape = 's32[]', space=sflag, size = 0x4, offset = 0, fixed_abs, tag = 'sflag constant byte address 0x0 - dummy sync flag']
  #allocation14 [shape = 's32[]', space=sflag, size = 0x4, offset = 0, fixed_abs, tag = 'sflag constant byte address 0x0 - dummy sync flag']
  #allocation15 [shape = 's32[]', space=sflag, size = 0x4, offset = 0, fixed_abs, tag = 'sflag constant byte address 0x0 - dummy sync flag']
  #allocation16 [shape = 's32[]', space=sflag, size = 0x4, offset = 0, fixed_abs, tag = 'sflag constant byte address 0x0 - dummy sync flag']
  #allocation17 [shape = 's32[]', space=sflag, size = 0x4, offset = 0, fixed_abs, tag = 'sflag constant byte address 0x0 - dummy sync flag']
  #allocation18 [shape = 's32[]', space=sflag, size = 0x4, offset = 0, fixed_abs, tag = 'sflag constant byte address 0x0 - dummy sync flag']
  #allocation19 [shape = 's32[]', space=sflag, size = 0x4, offset = 0, fixed_abs, tag = 'sflag constant byte address 0x0 - dummy sync flag']
  #allocation20 [shape = 's32[]', space=sflag, size = 0x4, offset = 0, fixed_abs, tag = 'sflag constant byte address 0x0 - dummy sync flag']
  #allocation21 [shape = 's32[]', space=sflag, size = 0x4, offset = 0, fixed_abs, tag = 'sflag constant byte address 0x0 - dummy sync flag']
  #allocation22 [shape = 's32[]', space=sflag, size = 0x4, offset = 0, fixed_abs, tag = 'sflag constant byte address 0x0 - dummy sync flag']
  #allocation23 [shape = 's32[]', space=sflag, size = 0x4, offset = 0, fixed_abs, tag = 'sflag constant byte address 0x0 - dummy sync flag']
  #allocation24 [shape = 's32[]', space=sflag, size = 0x4, offset = 0, fixed_abs, tag = 'sflag constant byte address 0x0 - dummy sync flag']
  #allocation25 [shape = 's32[]', space=sflag, size = 0x4, offset = 0, fixed_abs, tag = 'sflag constant byte address 0x0 - dummy sync flag']
  #allocation26 [shape = 's32[]', space=sflag, size = 0x4, offset = 0, fixed_abs, tag = 'sflag constant byte address 0x0 - dummy sync flag']
  #allocation27 [shape = 's32[]', space=sflag, size = 0x4, offset = 0, fixed_abs, tag = 'sflag constant byte address 0x0 - dummy sync flag']
  #allocation28 [shape = 's32[]', space=sflag, size = 0x4, offset = 0, fixed_abs, tag = 'sflag constant byte address 0x0 - dummy sync flag']
  #allocation29 [shape = 's32[]', space=sflag, size = 0x4, offset = 0, fixed_abs, tag = 'sflag constant byte address 0x0 - dummy sync flag']
  #allocation30 [shape = 's32[]', space=sflag, size = 0x4, offset = 0, fixed_abs, tag = 'sflag constant byte address 0x0 - dummy sync flag']
  #allocation31 [shape = 's32[]', space=sflag, size = 0x4, offset = 0, fixed_abs, tag = 'sflag constant byte address 0x0 - dummy sync flag']
  #allocation32 [shape = 's32[]', space=sflag, size = 0x4, offset = 0, fixed_abs, tag = 'sflag constant byte address 0x0 - dummy sync flag']
  #allocation33 [shape = 's32[]', space=sflag, size = 0x4, offset = 0, fixed_abs, tag = 'sflag constant byte address 0x0 - dummy sync flag']
  #allocation34 [shape = 's32[]', space=sflag, size = 0x4, offset = 0, fixed_abs, tag = 'sflag constant byte address 0x0 - dummy sync flag']
  #allocation35 [shape = 's32[]', space=sflag, size = 0x4, offset = 0, fixed_abs, tag = 'sflag constant byte address 0x0 - dummy sync flag']
  #allocation36 [shape = 's32[]', space=sflag, size = 0x4, offset = 0, fixed_abs, tag = 'sflag constant byte address 0x0 - dummy sync flag']
  #allocation37 [shape = 's32[]', space=sflag, size = 0x4, offset = 0, fixed_abs, tag = 'sflag constant byte address 0x0 - dummy sync flag']
  #allocation38 [shape = 's32[]', space=sflag, size = 0x4, offset = 0, fixed_abs, tag = 'sflag constant byte address 0x0 - dummy sync flag']
  #allocation39 [shape = 's32[]', space=sflag, size = 0x4, offset = 0, fixed_abs, tag = 'sflag constant byte address 0x0 - dummy sync flag']
  #allocation40 [shape = 's32[]', space=sflag, size = 0x4, offset = 0, fixed_abs, tag = 'sflag constant byte address 0x0 - dummy sync flag']
  #allocation41 [shape = 's32[]', space=sflag, size = 0x4, offset = 0, fixed_abs, tag = 'sflag constant byte address 0x0 - dummy sync flag']
  %s0 = inlined_call_operand.hbm [shape: s32[16], index: 0, kind: input, shape index: {}]
  %s1 = inlined_call_operand.hbm [shape: f32[16,32], index: 1, kind: input, shape index: {}]
  %s2 = inlined_call_operand.hbm [shape: f32[16,32], index: 2, kind: output, shape index: {}]
  %s3 = sld [smem:[#allocation0]]
  $region74: #{tpu_custom_call.1} parent=0
    _
  %s5 = ssub.s32 1, %s3
  %s6 = scalar_select 0, %s5, %s3
  %8 = dma.hbm_to_smem %s0, 16, [#allocation5], [#allocation4]
  %9 = dma.done [#allocation4], 16
  %10 = sfence
  $region1: #{tpu_custom_call.1} parent=0
    #allocation6 [shape = 'u8[8192]{0}', space=vmem, size = 0x2000, scoped, tag = 'output window, operand 0, single buffered']
    #allocation7 [shape = 's32[1]{0}', space=sflag, size = 0x4, scoped, tag = 'scoped memory for tpu_custom_call.1']
    %11 = vsyncpa [#allocation7], 0
    %s12 = smul.u32 0, 16
    %s13 = sld [smem:[#allocation5 + %s12]]
    %s14 = smul.addr %s13, 16
    %s15 = scalar_lea.hbm %s1, %s14
    // Predicated region
    $region2: #{tpu_custom_call.1} parent=1 // pred_check
      _
    $region3: #{tpu_custom_call.1} parent=1 // pred_check_branch
      %17 = sbr.rel target = $region5
    $region4: #{tpu_custom_call.1} parent=1 // pred_region
      %18 = sst [smem:[#allocation10]] [#allocation9]
      %19 = sst [smem:[#allocation11]] [#allocation8]
    $region5: #{tpu_custom_call.1} parent=1 // pred_fallthru
      _
    %21 = shalt.err (0)
    %s23 = sshll.u32 [#allocation2], 4
    %s24 = int_to_ptr.vmem [resolvable:$true] %s23
    %26 = dma.hbm_to_vmem [thread:$0]  %s15, 16, %s24, [#allocation3]
    %s27 = sadd.s32 %s12, 1
    %s28 = sld [smem:[#allocation5 + %s27]]
    %s29 = smul.addr %s28, 16
    %s30 = scalar_lea.hbm %s1, %s29
    %s31 = scalar_lea.vmem [#allocation2], 1
    %s32 = scalar_lea.sflag [#allocation3], 1
    // Predicated region
    $region6: #{tpu_custom_call.1} parent=1 // pred_check
      _
    $region7: #{tpu_custom_call.1} parent=1 // pred_check_branch
      %34 = sbr.rel target = $region9
    $region8: #{tpu_custom_call.1} parent=1 // pred_region
      %35 = sst [smem:[#allocation10]] [#allocation13]
      %36 = sst [smem:[#allocation11]] [#allocation12]
    $region9: #{tpu_custom_call.1} parent=1 // pred_fallthru
      _
    %38 = shalt.err (0)
    %s40 = sshll.u32 %s31, 4
    %s41 = int_to_ptr.vmem [resolvable:$true] %s40
    %43 = dma.hbm_to_vmem [thread:$0]  %s30, 16, %s41, %s32
    %s44 = sadd.s32 %s12, 2
    %s45 = sld [smem:[#allocation5 + %s44]]
    %s46 = smul.addr %s45, 16
    %s47 = scalar_lea.hbm %s1, %s46
    %s48 = scalar_lea.vmem [#allocation2], 2
    %s49 = scalar_lea.sflag [#allocation3], 2
    // Predicated region
    $region10: #{tpu_custom_call.1} parent=1 // pred_check
      _
    $region11: #{tpu_custom_call.1} parent=1 // pred_check_branch
      %51 = sbr.rel target = $region13
    $region12: #{tpu_custom_call.1} parent=1 // pred_region
      %52 = sst [smem:[#allocation10]] [#allocation15]
      %53 = sst [smem:[#allocation11]] [#allocation14]
    $region13: #{tpu_custom_call.1} parent=1 // pred_fallthru
      _
    %55 = shalt.err (0)
    %s57 = sshll.u32 %s48, 4
    %s58 = int_to_ptr.vmem [resolvable:$true] %s57
    %60 = dma.hbm_to_vmem [thread:$0]  %s47, 16, %s58, %s49
    %s61 = sadd.s32 %s12, 3
    %s62 = sld [smem:[#allocation5 + %s61]]
    %s63 = smul.addr %s62, 16
    %s64 = scalar_lea.hbm %s1, %s63
    %s65 = scalar_lea.vmem [#allocation2], 3
    %s66 = scalar_lea.sflag [#allocation3], 3
    // Predicated region
    $region14: #{tpu_custom_call.1} parent=1 // pred_check
      _
    $region15: #{tpu_custom_call.1} parent=1 // pred_check_branch
      %68 = sbr.rel target = $region17
    $region16: #{tpu_custom_call.1} parent=1 // pred_region
      %69 = sst [smem:[#allocation10]] [#allocation17]
      %70 = sst [smem:[#allocation11]] [#allocation16]
    $region17: #{tpu_custom_call.1} parent=1 // pred_fallthru
      _
    %72 = shalt.err (0)
    %s74 = sshll.u32 %s65, 4
    %s75 = int_to_ptr.vmem [resolvable:$true] %s74
    %77 = dma.hbm_to_vmem [thread:$0]  %s64, 16, %s75, %s66
    %s78 = sadd.s32 %s12, 4
    %s79 = sld [smem:[#allocation5 + %s78]]
    %s80 = smul.addr %s79, 16
    %s81 = scalar_lea.hbm %s1, %s80
    %s82 = scalar_lea.vmem [#allocation2], 4
    %s83 = scalar_lea.sflag [#allocation3], 4
    // Predicated region
    $region18: #{tpu_custom_call.1} parent=1 // pred_check
      _
    $region19: #{tpu_custom_call.1} parent=1 // pred_check_branch
      %85 = sbr.rel target = $region21
    $region20: #{tpu_custom_call.1} parent=1 // pred_region
      %86 = sst [smem:[#allocation10]] [#allocation19]
      %87 = sst [smem:[#allocation11]] [#allocation18]
    $region21: #{tpu_custom_call.1} parent=1 // pred_fallthru
      _
    %89 = shalt.err (0)
    %s91 = sshll.u32 %s82, 4
    %s92 = int_to_ptr.vmem [resolvable:$true] %s91
    %94 = dma.hbm_to_vmem [thread:$0]  %s81, 16, %s92, %s83
    %s95 = sadd.s32 %s12, 5
    %s96 = sld [smem:[#allocation5 + %s95]]
    %s97 = smul.addr %s96, 16
    %s98 = scalar_lea.hbm %s1, %s97
    %s99 = scalar_lea.vmem [#allocation2], 5
    %s100 = scalar_lea.sflag [#allocation3], 5
    // Predicated region
    $region22: #{tpu_custom_call.1} parent=1 // pred_check
      _
    $region23: #{tpu_custom_call.1} parent=1 // pred_check_branch
      %102 = sbr.rel target = $region25
    $region24: #{tpu_custom_call.1} parent=1 // pred_region
      %103 = sst [smem:[#allocation10]] [#allocation21]
      %104 = sst [smem:[#allocation11]] [#allocation20]
    $region25: #{tpu_custom_call.1} parent=1 // pred_fallthru
      _
    %106 = shalt.err (0)
    %s108 = sshll.u32 %s99, 4
    %s109 = int_to_ptr.vmem [resolvable:$true] %s108
    %111 = dma.hbm_to_vmem [thread:$0]  %s98, 16, %s109, %s100
    %s112 = sadd.s32 %s12, 6
    %s113 = sld [smem:[#allocation5 + %s112]]
    %s114 = smul.addr %s113, 16
    %s115 = scalar_lea.hbm %s1, %s114
    %s116 = scalar_lea.vmem [#allocation2], 6
    %s117 = scalar_lea.sflag [#allocation3], 6
    // Predicated region
    $region26: #{tpu_custom_call.1} parent=1 // pred_check
      _
    $region27: #{tpu_custom_call.1} parent=1 // pred_check_branch
      %119 = sbr.rel target = $region29
    $region28: #{tpu_custom_call.1} parent=1 // pred_region
      %120 = sst [smem:[#allocation10]] [#allocation23]
      %121 = sst [smem:[#allocation11]] [#allocation22]
    $region29: #{tpu_custom_call.1} parent=1 // pred_fallthru
      _
    %123 = shalt.err (0)
    %s125 = sshll.u32 %s116, 4
    %s126 = int_to_ptr.vmem [resolvable:$true] %s125
    %128 = dma.hbm_to_vmem [thread:$0]  %s115, 16, %s126, %s117
    %s129 = sadd.s32 %s12, 7
    %s130 = sld [smem:[#allocation5 + %s129]]
    %s131 = smul.addr %s130, 16
    %s132 = scalar_lea.hbm %s1, %s131
    %s133 = scalar_lea.vmem [#allocation2], 7
    %s134 = scalar_lea.sflag [#allocation3], 7
    // Predicated region
    $region30: #{tpu_custom_call.1} parent=1 // pred_check
      _
    $region31: #{tpu_custom_call.1} parent=1 // pred_check_branch
      %136 = sbr.rel target = $region33
    $region32: #{tpu_custom_call.1} parent=1 // pred_region
      %137 = sst [smem:[#allocation10]] [#allocation25]
      %138 = sst [smem:[#allocation11]] [#allocation24]
    $region33: #{tpu_custom_call.1} parent=1 // pred_fallthru
      _
    %140 = shalt.err (0)
    %s142 = sshll.u32 %s133, 4
    %s143 = int_to_ptr.vmem [resolvable:$true] %s142
    %145 = dma.hbm_to_vmem [thread:$0]  %s132, 16, %s143, %s134
    %s146 = sadd.s32 %s12, 8
    %s147 = sld [smem:[#allocation5 + %s146]]
    %s148 = smul.addr %s147, 16
    %s149 = scalar_lea.hbm %s1, %s148
    %s150 = scalar_lea.vmem [#allocation2], 8
    %s151 = scalar_lea.sflag [#allocation3], 8
    // Predicated region
    $region34: #{tpu_custom_call.1} parent=1 // pred_check
      _
    $region35: #{tpu_custom_call.1} parent=1 // pred_check_branch
      %153 = sbr.rel target = $region37
    $region36: #{tpu_custom_call.1} parent=1 // pred_region
      %154 = sst [smem:[#allocation10]] [#allocation27]
      %155 = sst [smem:[#allocation11]] [#allocation26]
    $region37: #{tpu_custom_call.1} parent=1 // pred_fallthru
      _
    %157 = shalt.err (0)
    %s159 = sshll.u32 %s150, 4
    %s160 = int_to_ptr.vmem [resolvable:$true] %s159
    %162 = dma.hbm_to_vmem [thread:$0]  %s149, 16, %s160, %s151
    %s163 = sadd.s32 %s12, 9
    %s164 = sld [smem:[#allocation5 + %s163]]
    %s165 = smul.addr %s164, 16
    %s166 = scalar_lea.hbm %s1, %s165
    %s167 = scalar_lea.vmem [#allocation2], 9
    %s168 = scalar_lea.sflag [#allocation3], 9
    // Predicated region
    $region38: #{tpu_custom_call.1} parent=1 // pred_check
      _
    $region39: #{tpu_custom_call.1} parent=1 // pred_check_branch
      %170 = sbr.rel target = $region41
    $region40: #{tpu_custom_call.1} parent=1 // pred_region
      %171 = sst [smem:[#allocation10]] [#allocation29]
      %172 = sst [smem:[#allocation11]] [#allocation28]
    $region41: #{tpu_custom_call.1} parent=1 // pred_fallthru
      _
    %174 = shalt.err (0)
    %s176 = sshll.u32 %s167, 4
    %s177 = int_to_ptr.vmem [resolvable:$true] %s176
    %179 = dma.hbm_to_vmem [thread:$0]  %s166, 16, %s177, %s168
    %s180 = sadd.s32 %s12, 10
    %s181 = sld [smem:[#allocation5 + %s180]]
    %s182 = smul.addr %s181, 16
    %s183 = scalar_lea.hbm %s1, %s182
    %s184 = scalar_lea.vmem [#allocation2], 10
    %s185 = scalar_lea.sflag [#allocation3], 10
    // Predicated region
    $region42: #{tpu_custom_call.1} parent=1 // pred_check
      _
    $region43: #{tpu_custom_call.1} parent=1 // pred_check_branch
      %187 = sbr.rel target = $region45
    $region44: #{tpu_custom_call.1} parent=1 // pred_region
      %188 = sst [smem:[#allocation10]] [#allocation31]
      %189 = sst [smem:[#allocation11]] [#allocation30]
    $region45: #{tpu_custom_call.1} parent=1 // pred_fallthru
      _
    %191 = shalt.err (0)
    %s193 = sshll.u32 %s184, 4
    %s194 = int_to_ptr.vmem [resolvable:$true] %s193
    %196 = dma.hbm_to_vmem [thread:$0]  %s183, 16, %s194, %s185
    %s197 = sadd.s32 %s12, 11
    %s198 = sld [smem:[#allocation5 + %s197]]
    %s199 = smul.addr %s198, 16
    %s200 = scalar_lea.hbm %s1, %s199
    %s201 = scalar_lea.vmem [#allocation2], 11
    %s202 = scalar_lea.sflag [#allocation3], 11
    // Predicated region
    $region46: #{tpu_custom_call.1} parent=1 // pred_check
      _
    $region47: #{tpu_custom_call.1} parent=1 // pred_check_branch
      %204 = sbr.rel target = $region49
    $region48: #{tpu_custom_call.1} parent=1 // pred_region
      %205 = sst [smem:[#allocation10]] [#allocation33]
      %206 = sst [smem:[#allocation11]] [#allocation32]
    $region49: #{tpu_custom_call.1} parent=1 // pred_fallthru
      _
    %208 = shalt.err (0)
    %s210 = sshll.u32 %s201, 4
    %s211 = int_to_ptr.vmem [resolvable:$true] %s210
    %213 = dma.hbm_to_vmem [thread:$0]  %s200, 16, %s211, %s202
    %s214 = sadd.s32 %s12, 12
    %s215 = sld [smem:[#allocation5 + %s214]]
    %s216 = smul.addr %s215, 16
    %s217 = scalar_lea.hbm %s1, %s216
    %s218 = scalar_lea.vmem [#allocation2], 12
    %s219 = scalar_lea.sflag [#allocation3], 12
    // Predicated region
    $region50: #{tpu_custom_call.1} parent=1 // pred_check
      _
    $region51: #{tpu_custom_call.1} parent=1 // pred_check_branch
      %221 = sbr.rel target = $region53
    $region52: #{tpu_custom_call.1} parent=1 // pred_region
      %222 = sst [smem:[#allocation10]] [#allocation35]
      %223 = sst [smem:[#allocation11]] [#allocation34]
    $region53: #{tpu_custom_call.1} parent=1 // pred_fallthru
      _
    %225 = shalt.err (0)
    %s227 = sshll.u32 %s218, 4
    %s228 = int_to_ptr.vmem [resolvable:$true] %s227
    %230 = dma.hbm_to_vmem [thread:$0]  %s217, 16, %s228, %s219
    %s231 = sadd.s32 %s12, 13
    %s232 = sld [smem:[#allocation5 + %s231]]
    %s233 = smul.addr %s232, 16
    %s234 = scalar_lea.hbm %s1, %s233
    %s235 = scalar_lea.vmem [#allocation2], 13
    %s236 = scalar_lea.sflag [#allocation3], 13
    // Predicated region
    $region54: #{tpu_custom_call.1} parent=1 // pred_check
      _
    $region55: #{tpu_custom_call.1} parent=1 // pred_check_branch
      %238 = sbr.rel target = $region57
    $region56: #{tpu_custom_call.1} parent=1 // pred_region
      %239 = sst [smem:[#allocation10]] [#allocation37]
      %240 = sst [smem:[#allocation11]] [#allocation36]
    $region57: #{tpu_custom_call.1} parent=1 // pred_fallthru
      _
    %242 = shalt.err (0)
    %s244 = sshll.u32 %s235, 4
    %s245 = int_to_ptr.vmem [resolvable:$true] %s244
    %247 = dma.hbm_to_vmem [thread:$0]  %s234, 16, %s245, %s236
    %s248 = sadd.s32 %s12, 14
    %s249 = sld [smem:[#allocation5 + %s248]]
    %s250 = smul.addr %s249, 16
    %s251 = scalar_lea.hbm %s1, %s250
    %s252 = scalar_lea.vmem [#allocation2], 14
    %s253 = scalar_lea.sflag [#allocation3], 14
    // Predicated region
    $region58: #{tpu_custom_call.1} parent=1 // pred_check
      _
    $region59: #{tpu_custom_call.1} parent=1 // pred_check_branch
      %255 = sbr.rel target = $region61
    $region60: #{tpu_custom_call.1} parent=1 // pred_region
      %256 = sst [smem:[#allocation10]] [#allocation39]
      %257 = sst [smem:[#allocation11]] [#allocation38]
    $region61: #{tpu_custom_call.1} parent=1 // pred_fallthru
      _
    %259 = shalt.err (0)
    %s261 = sshll.u32 %s252, 4
    %s262 = int_to_ptr.vmem [resolvable:$true] %s261
    %264 = dma.hbm_to_vmem [thread:$0]  %s251, 16, %s262, %s253
    %s265 = sadd.s32 %s12, 15
    %s266 = sld [smem:[#allocation5 + %s265]]
    %s267 = smul.addr %s266, 16
    %s268 = scalar_lea.hbm %s1, %s267
    %s269 = scalar_lea.vmem [#allocation2], 15
    %s270 = scalar_lea.sflag [#allocation3], 15
    // Predicated region
    $region62: #{tpu_custom_call.1} parent=1 // pred_check
      _
    $region63: #{tpu_custom_call.1} parent=1 // pred_check_branch
      %272 = sbr.rel target = $region65
    $region64: #{tpu_custom_call.1} parent=1 // pred_region
      %273 = sst [smem:[#allocation10]] [#allocation41]
      %274 = sst [smem:[#allocation11]] [#allocation40]
    $region65: #{tpu_custom_call.1} parent=1 // pred_fallthru
      _
    %276 = shalt.err (0)
    %s278 = sshll.u32 %s269, 4
    %s279 = int_to_ptr.vmem [resolvable:$true] %s278
    %281 = dma.hbm_to_vmem [thread:$0]  %s268, 16, %s279, %s270
    %283 = dma.done [#allocation3], 16
    %285 = dma.done %s32, 16
    %287 = dma.done %s49, 16
    %289 = dma.done %s66, 16
    %291 = dma.done %s83, 16
    %293 = dma.done %s100, 16
    %295 = dma.done %s117, 16
    %297 = dma.done %s134, 16
    %299 = dma.done %s151, 16
    %301 = dma.done %s168, 16
    %303 = dma.done %s185, 16
    %305 = dma.done %s202, 16
    %307 = dma.done %s219, 16
    %309 = dma.done %s236, 16
    %311 = dma.done %s253, 16
    %313 = dma.done %s270, 16
    %v314 = vld [vmem:[#allocation2] sm:$0xff]
    %v315 = vld [vmem:[#allocation2 + $0x8] sm:$0xff]
    %vm316 = vcmask 261120
    %317 = vst.msk [vmem:[#allocation6] sm:$0xff] %vm316, %v314
    %318 = vst.msk [vmem:[#allocation6 + $0x8] sm:$0xff] %vm316, %v315
    // Predicated region
    $region66: #{tpu_custom_call.1} parent=1 // pred_check
      _
    $region67: #{tpu_custom_call.1} parent=1 // pred_check_branch
      %320 = sbr.rel (0) target = $region69
    $region68: #{tpu_custom_call.1} parent=1 // pred_region
      %s322 = ssub.s32 256, 256
      %323 = vsyncadd [#allocation7], %s322
      %s324 = sshll.u32 [#allocation6], 4
      %s325 = int_to_ptr.vmem [resolvable:$true] %s324
      %330 = dma.vmem_to_hbm [thread:$0]  %s325, 256, %s2, [#allocation7], 128, 128, 8
    $region69: #{tpu_custom_call.1} parent=1 // pred_fallthru
      _
    // Predicated region
    $region70: #{tpu_custom_call.1} parent=1 // pred_check
      _
    $region71: #{tpu_custom_call.1} parent=1 // pred_check_branch
      %332 = sbr.rel (0) target = $region73
    $region72: #{tpu_custom_call.1} parent=1 // pred_region
      %333 = dma.done [#allocation7], 256
    $region73: #{tpu_custom_call.1} parent=1 // pred_fallthru
      _
    %334 = vsyncpa [#allocation7], 1
  %335 = vsyncmov [#allocation3]
  %s336 = vpop.sfrf %335
  %p337 = scmp.eq.s32.totalorder %s336, 0
  %p338 = pneg %p337
  %340 = shalt.err (%p338)
  %s341 = scalar_lea.sflag [#allocation3], 1
  %342 = vsyncmov %s341
  %s343 = vpop.sfrf %342
  %p344 = scmp.eq.s32.totalorder %s343, 0
  %p345 = pneg %p344
  %347 = shalt.err (%p345)
  %s348 = scalar_lea.sflag [#allocation3], 2
  %349 = vsyncmov %s348
  %s350 = vpop.sfrf %349
  %p351 = scmp.eq.s32.totalorder %s350, 0
  %p352 = pneg %p351
  %354 = shalt.err (%p352)
  %s355 = scalar_lea.sflag [#allocation3], 3
  %356 = vsyncmov %s355
  %s357 = vpop.sfrf %356
  %p358 = scmp.eq.s32.totalorder %s357, 0
  %p359 = pneg %p358
  %361 = shalt.err (%p359)
  %s362 = scalar_lea.sflag [#allocation3], 4
  %363 = vsyncmov %s362
  %s364 = vpop.sfrf %363
  %p365 = scmp.eq.s32.totalorder %s364, 0
  %p366 = pneg %p365
  %368 = shalt.err (%p366)
  %s369 = scalar_lea.sflag [#allocation3], 5
  %370 = vsyncmov %s369
  %s371 = vpop.sfrf %370
  %p372 = scmp.eq.s32.totalorder %s371, 0
  %p373 = pneg %p372
  %375 = shalt.err (%p373)
  %s376 = scalar_lea.sflag [#allocation3], 6
  %377 = vsyncmov %s376
  %s378 = vpop.sfrf %377
  %p379 = scmp.eq.s32.totalorder %s378, 0
  %p380 = pneg %p379
  %382 = shalt.err (%p380)
  %s383 = scalar_lea.sflag [#allocation3], 7
  %384 = vsyncmov %s383
  %s385 = vpop.sfrf %384
  %p386 = scmp.eq.s32.totalorder %s385, 0
  %p387 = pneg %p386
  %389 = shalt.err (%p387)
  %s390 = scalar_lea.sflag [#allocation3], 8
  %391 = vsyncmov %s390
  %s392 = vpop.sfrf %391
  %p393 = scmp.eq.s32.totalorder %s392, 0
  %p394 = pneg %p393
  %396 = shalt.err (%p394)
  %s397 = scalar_lea.sflag [#allocation3], 9
  %398 = vsyncmov %s397
  %s399 = vpop.sfrf %398
  %p400 = scmp.eq.s32.totalorder %s399, 0
  %p401 = pneg %p400
  %403 = shalt.err (%p401)
  %s404 = scalar_lea.sflag [#allocation3], 10
  %405 = vsyncmov %s404
  %s406 = vpop.sfrf %405
  %p407 = scmp.eq.s32.totalorder %s406, 0
  %p408 = pneg %p407
  %410 = shalt.err (%p408)
  %s411 = scalar_lea.sflag [#allocation3], 11
  %412 = vsyncmov %s411
  %s413 = vpop.sfrf %412
  %p414 = scmp.eq.s32.totalorder %s413, 0
  %p415 = pneg %p414
  %417 = shalt.err (%p415)
  %s418 = scalar_lea.sflag [#allocation3], 12
  %419 = vsyncmov %s418
  %s420 = vpop.sfrf %419
  %p421 = scmp.eq.s32.totalorder %s420, 0
  %p422 = pneg %p421
  %424 = shalt.err (%p422)
  %s425 = scalar_lea.sflag [#allocation3], 13
  %426 = vsyncmov %s425
  %s427 = vpop.sfrf %426
  %p428 = scmp.eq.s32.totalorder %s427, 0
  %p429 = pneg %p428
  %431 = shalt.err (%p429)
  %s432 = scalar_lea.sflag [#allocation3], 14
  %433 = vsyncmov %s432
  %s434 = vpop.sfrf %433
  %p435 = scmp.eq.s32.totalorder %s434, 0
  %p436 = pneg %p435
  %438 = shalt.err (%p436)
  %s439 = scalar_lea.sflag [#allocation3], 15
  %440 = vsyncmov %s439
  %s441 = vpop.sfrf %440
  %p442 = scmp.eq.s32.totalorder %s441, 0
  %p443 = pneg %p442
  %445 = shalt.err (%p443)

</llo_original>
